<compile_context>
chip_gen: v6e
topology: v6e:2x2x1
jax: 0.10.0
libtpu: 0.0.40
codegen_flags: <defaults>
</compile_context>

<pallas_src>
import functools

import jax
import jax.numpy as jnp
from jax import lax
from jax.experimental import pallas as pl
from jax.experimental.pallas import tpu as pltpu

_NEG_SLOPE = 0.01  # PyTorch nn.LeakyReLU default


def _round_up(x, m):
    return (x + m - 1) // m * m


def _conv_matmul_kernel(x_ref, w_ref, b_ref, o_ref):
    # x_ref: (1, K, TM)     streamed K-major patch columns for one batch item
    # w_ref: (C_out, K)     VMEM-resident weight (constant index_map)
    # b_ref: (C_out, 1)     VMEM-resident bias
    # o_ref: (1, C_out, TM) lane-dense, channel-major output tile (-> NCDHW via free reshape)
    acc = jnp.dot(w_ref[...], x_ref[0], preferred_element_type=jnp.float32)
    acc = acc + b_ref[...].astype(jnp.float32)
    o_ref[0] = jnp.where(acc >= 0, acc, _NEG_SLOPE * acc).astype(o_ref.dtype)


def _pick_vmem_limit_bytes():
    # ~48 MiB of 64 on v7x, 64 MiB of 128 on v5e/v6e; safe fallback if the query fails.
    try:
        info = pltpu.get_tpu_info()
        phys = int(getattr(info, "vmem_capacity_bytes", 0)) or (128 << 20)
    except Exception:  # pragma: no cover - defensive, e.g. interpret mode
        phys = 128 << 20
    return int(min(64 << 20, (phys * 3) // 4))


def downsampling_conv_block(x, weight, bias, stride=2):
    """x: (N, C_in, D, H, W); weight: (C_out, C_in, k, k, k), k == stride; bias: (C_out,)."""
    N, C_in, D, H, W = x.shape
    C_out = weight.shape[0]
    k = stride
    Do, Ho, Wo = D // k, H // k, W // k
    Mn = Do * Ho * Wo
    K = C_in * k * k * k

    # PyTorch Conv3d silently drops trailing rows that don't fill a full window.
    x = x[:, :, : Do * k, : Ho * k, : Wo * k]

    # K-major patch matrix per batch item: (N, K, Mn), K ordered (C_in, kd, kh, kw) to match the
    # PyTorch weight layout, Mn ordered (Do, Ho, Wo) so the channel-major kernel output reshapes
    # straight back to NCDHW (no output transpose pass).
    xp = x.reshape(N, C_in, Do, k, Ho, k, Wo, k)
    xp = jnp.transpose(xp, (0, 1, 3, 5, 7, 2, 4, 6))     # (N, C_in, kd, kh, kw, Do, Ho, Wo)
    x2d = xp.reshape(N, K, Mn)

    w2d = weight.reshape(C_out, K)                        # no channel padding
    b2d = bias.reshape(C_out, 1)

    # ---- choose the lane tile TM along Mn ----
    itemsize = jnp.dtype(x.dtype).itemsize
    lane = 128
    sub = 8 * max(1, 4 // itemsize)                       # sublane multiple: f32->8, bf16->16, i8->32
    vmem_limit = _pick_vmem_limit_bytes()

    if Mn <= lane:
        tm = Mn                                           # full-extent block is always legal
    else:
        # Budget = VMEM limit - resident (possibly double-buffered) weight/bias - margin.
        resident = 2 * _round_up(C_out, sub) * (_round_up(K, lane) + lane) * itemsize
        budget = max(2 << 20, vmem_limit - resident - (4 << 20))
        # Double-buffered streamed x tile + out tile, per lane column, with sublane padding.
        per_col = 2 * (_round_up(K, sub) + _round_up(C_out, sub)) * itemsize
        tm = (budget // per_col) // lane * lane
        tm = int(max(lane, min(tm, 2048)))
        # Keep at least ~4 total grid steps so megacore sharding / pipelining engage (v7x).
        min_j = -(-4 // N)
        tm = max(lane, min(tm, _round_up(pl.cdiv(Mn, min_j), lane)))

    grid = (N, pl.cdiv(Mn, tm))

    cost = pl.CostEstimate(
        flops=2 * N * Mn * K * C_out,
        transcendentals=0,
        bytes_accessed=itemsize * (N * K * Mn + C_out * K + C_out + N * C_out * Mn),
    )

    y = pl.pallas_call(
        _conv_matmul_kernel,
        out_shape=jax.ShapeDtypeStruct((N, C_out, Mn), x.dtype),
        grid_spec=pl.GridSpec(
            grid=grid,
            in_specs=[
                pl.BlockSpec((1, K, tm), lambda n, j: (n, 0, j)),   # streamed patch columns
                pl.BlockSpec((C_out, K), lambda n, j: (0, 0)),      # resident weight
                pl.BlockSpec((C_out, 1), lambda n, j: (0, 0)),      # resident bias
            ],
            out_specs=pl.BlockSpec((1, C_out, tm), lambda n, j: (n, 0, j)),
        ),
        compiler_params=pltpu.CompilerParams(
            dimension_semantics=("parallel", "parallel"),           # megacore-shard on v7x
            vmem_limit_bytes=vmem_limit,
        ),
        cost_estimate=cost,
    )(x2d, w2d, b2d)

    return y.reshape(N, C_out, Do, Ho, Wo)


def _reference(x, weight, bias, stride=2):
    # Pure-JAX reference (NCDHW / OIDHW conv + bias + LeakyReLU(0.01)).
    y = lax.conv_general_dilated(
        x, weight,
        window_strides=(stride, stride, stride),
        padding="VALID",
        dimension_numbers=("NCDHW", "OIDHW", "NCDHW"),
    )
    y = y + bias.reshape(1, -1, 1, 1, 1)
    return jnp.where(y >= 0, y, _NEG_SLOPE * y)


if __name__ == "__main__":
    key = jax.random.PRNGKey(0)
    k_x, k_w, k_b = jax.random.split(key, 3)

    N, C_in, C_out, D, H, W = 2, 4, 8, 8, 8, 8
    stride = 2

    x = jax.random.normal(k_x, (N, C_in, D, H, W), dtype=jnp.float32)
    # Deterministic synthetic parameters, PyTorch shape conventions.
    fan_in = C_in * stride ** 3
    bound = 1.0 / (fan_in ** 0.5)
    weight = jax.random.uniform(k_w, (C_out, C_in, stride, stride, stride),
                                minval=-bound, maxval=bound, dtype=jnp.float32)
    bias = jax.random.uniform(k_b, (C_out,), minval=-bound, maxval=bound, dtype=jnp.float32)

    fwd = jax.jit(functools.partial(downsampling_conv_block, stride=stride))
    y = fwd(x, weight, bias)
    jax.block_until_ready(y)

    y_ref = _reference(x, weight, bias, stride=stride)
    assert y.shape == (N, C_out, D // stride, H // stride, W // stride)
    assert jnp.allclose(y, y_ref, atol=1e-4, rtol=1e-4), float(jnp.max(jnp.abs(y - y_ref)))

    print("KERNEL_OK")
</pallas_src>

<mosaic_0001>
module attributes {stable_mosaic.version = 11 : i64} {
  func.func @_conv_matmul_kernel(%arg0: i32, %arg1: i32, %arg2: memref<1x32x64xf32, #tpu.memory_space<vmem>>, %arg3: memref<8x32xf32, #tpu.memory_space<vmem>>, %arg4: memref<8x1xf32, #tpu.memory_space<vmem>>, %arg5: memref<1x8x64xf32, #tpu.memory_space<vmem>>) attributes {dimension_semantics = [#tpu.dimension_semantics<parallel>, #tpu.dimension_semantics<parallel>], iteration_bounds = array<i64: 2, 1>, scalar_prefetch = 0 : i64, scratch_operands = 0 : i64, tpu.core_type = #tpu.core_type<tc>, window_params = [{transform_indices = @transform_0, window_bounds = array<i64: 1, 32, 64>}, {pipeline_mode = #tpu.pipeline_mode<synchronous>, transform_indices = @transform_1, window_bounds = array<i64: 8, 32>}, {pipeline_mode = #tpu.pipeline_mode<synchronous>, transform_indices = @transform_2, window_bounds = array<i64: 8, 1>}, {transform_indices = @transform_3, window_bounds = array<i64: 1, 8, 64>}]} {
    %c0 = arith.constant 0 : index
    %c0_0 = arith.constant 0 : index
    %0 = vector.load %arg3[%c0, %c0_0] : memref<8x32xf32, #tpu.memory_space<vmem>>, vector<8x32xf32>
    %c0_1 = arith.constant 0 : index
    %c0_2 = arith.constant 0 : index
    %c0_3 = arith.constant 0 : index
    %1 = vector.load %arg2[%c0_1, %c0_2, %c0_3] : memref<1x32x64xf32, #tpu.memory_space<vmem>>, vector<1x32x64xf32>
    %2 = vector.shape_cast %1 : vector<1x32x64xf32> to vector<32x64xf32>
    %cst = arith.constant dense<0.000000e+00> : vector<8x64xf32>
    %3 = tpu.matmul %0, %2, %cst {dimension_numbers = #tpu.dot_dimension_numbers<[1], [0], [0], [1], [0, 0, 1, 1], [], []>} : vector<8x32xf32>, vector<32x64xf32>, vector<8x64xf32> -> vector<8x64xf32>
    %c0_4 = arith.constant 0 : index
    %c0_5 = arith.constant 0 : index
    %4 = vector.load %arg4[%c0_4, %c0_5] : memref<8x1xf32, #tpu.memory_space<vmem>>, vector<8x1xf32>
    %5 = vector.broadcast %4 : vector<8x1xf32> to vector<8x64xf32>
    %6 = arith.addf %3, %5 : vector<8x64xf32>
    %cst_6 = arith.constant 0.000000e+00 : f32
    %7 = vector.broadcast %cst_6 : f32 to vector<8x64xf32>
    %8 = arith.cmpf oge, %6, %7 : vector<8x64xf32>
    %cst_7 = arith.constant 0.00999999977 : f32
    %9 = vector.broadcast %cst_7 : f32 to vector<8x64xf32>
    %10 = arith.mulf %9, %6 : vector<8x64xf32>
    %11 = arith.select %8, %6, %10 : vector<8x64xi1>, vector<8x64xf32>
    %c0_8 = arith.constant 0 : index
    %c0_9 = arith.constant 0 : index
    %c0_10 = arith.constant 0 : index
    %12 = vector.load %arg5[%c0_8, %c0_9, %c0_10] : memref<1x8x64xf32, #tpu.memory_space<vmem>>, vector<1x8x64xf32>
    %13 = vector.shape_cast %12 : vector<1x8x64xf32> to vector<8x64xf32>
    %14 = vector.shape_cast %11 : vector<8x64xf32> to vector<1x8x64xf32>
    tpu.vector_store %arg5[%c0_8, %c0_9, %c0_10], %14 {strides = array<i32>} : memref<1x8x64xf32, #tpu.memory_space<vmem>>, vector<1x8x64xf32>,
    return
  }
  func.func @transform_0(%arg0: i32, %arg1: i32) -> (i32, i32, i32) {
    %c0_i32 = arith.constant 0 : i32
    %c0_i32_0 = arith.constant 0 : i32
    return %arg0, %c0_i32, %arg1 : i32, i32, i32
  }
  func.func @transform_1(%arg0: i32, %arg1: i32) -> (i32, i32) {
    %c0_i32 = arith.constant 0 : i32
    %c0_i32_0 = arith.constant 0 : i32
    %c0_i32_1 = arith.constant 0 : i32
    return %c0_i32, %c0_i32_0 : i32, i32
  }
  func.func @transform_2(%arg0: i32, %arg1: i32) -> (i32, i32) {
    %c0_i32 = arith.constant 0 : i32
    %c0_i32_0 = arith.constant 0 : i32
    %c0_i32_1 = arith.constant 0 : i32
    return %c0_i32, %c0_i32_0 : i32, i32
  }
  func.func @transform_3(%arg0: i32, %arg1: i32) -> (i32, i32, i32) {
    %c0_i32 = arith.constant 0 : i32
    %c0_i32_0 = arith.constant 0 : i32
    return %arg0, %c0_i32, %arg1 : i32, i32, i32
  }
}

</mosaic_0001>

<llo_original>
// kernel: downsampling_conv_block.1
$region0: #{downsampling_conv_block.1}
  #allocation0 [shape = 'u32[]', space=smem, size = 0x4, offset = 0x4, fixed_abs, tag = 'smem constant byte address 0x4 - core index']
  #allocation1 [shape = 'u32[144,128]{1,0:T(1,128)}', space=vmem, size = 0x12000, scoped, tag = 'internal scratch']
  %s0 = inlined_call_operand.vmem [shape: f32[2,32,64], index: 0, kind: input, shape index: {}]
  %s1 = inlined_call_operand.vmem [shape: f32[8,32], index: 1, kind: input, shape index: {}]
  %s2 = inlined_call_operand.vmem [shape: f32[8,1], index: 2, kind: input, shape index: {}]
  %s3 = inlined_call_operand.vmem [shape: f32[2,8,64], index: 3, kind: output, shape index: {}]
  %s4 = sld [smem:[#allocation0]]
  $region45: #{downsampling_conv_block.1} parent=0
    _
  %s6 = ssub.s32 1, %s4
  %s7 = scalar_select 0, %s6, %s4
  loop: start=0, step=1, limit=4
  $region2: #{downsampling_conv_block.1} parent=0 // loop_pre_header
    _
  $region3: #{downsampling_conv_block.1} parent=0 // loop_header
    %s9 = sphi 0, %s13
    %p10 = scmp.ge.s32.totalorder %s9, 4
    %s16 = sphi 0, %s28
    %s17 = sphi 0, %s24
    %s18 = sphi 0, %s16
    %s19 = sphi 0, %s17
    %s20 = sphi 0, %s18
    %s21 = sphi 0, %s19
    %s33 = sphi 0, %s35
    %s36 = sphi 0, %s33
    %s37 = sphi 0, %s36
    %s53 = sphi 0, %s37
    %s57 = sphi 0, %s57
    %s59 = sphi 0, %s57
    %s60 = sphi 0, %s59
    %s74 = sphi 0, %s60
    %s78 = sphi 0, %s78
    %s80 = sphi 0, %s78
    %s81 = sphi 0, %s80
    %s95 = sphi 0, %s81
    %s103 = sphi 0, %s105
    %s106 = sphi 0, %s103
    %s107 = sphi 0, %s106
    %s123 = sphi 0, %s107
  $region4: #{downsampling_conv_block.1} parent=0 // loop_header_branch
    %12 = sbr.rel (%p10) target = $region8
  $region5: #{downsampling_conv_block.1} parent=0 // loop_body
    %s14 = ssub.s32 %s9, 1
    %s15 = ssub.s32 %s9, 2
    %s22 = sadd.s32 1, %s17
    %p23 = scmp.ge.s32.totalorder %s22, 1
    %s24 = scalar_select %p23, 0, %s22
    %s25 = sadd.s32 1, %s16
    %s26 = scalar_select %p23, %s25, %s16
    %p27 = scmp.ge.s32.totalorder %s26, 2
    %s28 = scalar_select %p27, 0, %s26
    %s29 = ssub.s32 %s16, %s28
    %s30 = ssub.s32 %s17, %s24
    %s31 = sor.u32 %s29, %s30
    %p32 = scmp.eq.s32.totalorder %s31, 0
    %s34 = sadd.s32 %s33, 1
    %s35 = scalar_select %p32, %s33, %s34
    %p38 = pneg %p32
    %p39 = scmp.eq.s32.totalorder %s9, 1
    %p40 = por %p38, %p39
    %p41 = scmp.ne.s32.totalorder %s33, %s36
    %p42 = scmp.eq.s32.totalorder %s9, 0
    %p43 = por %p41, %p42
    %p44 = scmp.ne.s32.totalorder %s33, %s36
    %p45 = scmp.eq.s32.totalorder %s14, 1
    %p46 = por %p44, %p45
    %p47 = scmp.ne.s32.totalorder %s36, %s37
    %p48 = scmp.eq.s32.totalorder %s14, 0
    %p49 = por %p47, %p48
    %p50 = scmp.ne.s32.totalorder %s36, %s37
    %p51 = scmp.eq.s32.totalorder %s15, 1
    %p52 = por %p50, %p51
    %p54 = scmp.ne.s32.totalorder %s37, %s53
    %p55 = scmp.eq.s32.totalorder %s15, 0
    %p56 = por %p54, %p55
    %s58 = sadd.s32 %s57, 1
    %p61 = scmp.eq.s32.totalorder %s9, 1
    %p62 = scmp.ne.s32.totalorder %s57, %s59
    %p63 = scmp.eq.s32.totalorder %s9, 0
    %p64 = por %p62, %p63
    %p65 = scmp.ne.s32.totalorder %s57, %s59
    %p66 = scmp.eq.s32.totalorder %s14, 1
    %p67 = por %p65, %p66
    %p68 = scmp.ne.s32.totalorder %s59, %s60
    %p69 = scmp.eq.s32.totalorder %s14, 0
    %p70 = por %p68, %p69
    %p71 = scmp.ne.s32.totalorder %s59, %s60
    %p72 = scmp.eq.s32.totalorder %s15, 1
    %p73 = por %p71, %p72
    %p75 = scmp.ne.s32.totalorder %s60, %s74
    %p76 = scmp.eq.s32.totalorder %s15, 0
    %p77 = por %p75, %p76
    %s79 = sadd.s32 %s78, 1
    %p82 = scmp.eq.s32.totalorder %s9, 1
    %p83 = scmp.ne.s32.totalorder %s78, %s80
    %p84 = scmp.eq.s32.totalorder %s9, 0
    %p85 = por %p83, %p84
    %p86 = scmp.ne.s32.totalorder %s78, %s80
    %p87 = scmp.eq.s32.totalorder %s14, 1
    %p88 = por %p86, %p87
    %p89 = scmp.ne.s32.totalorder %s80, %s81
    %p90 = scmp.eq.s32.totalorder %s14, 0
    %p91 = por %p89, %p90
    %p92 = scmp.ne.s32.totalorder %s80, %s81
    %p93 = scmp.eq.s32.totalorder %s15, 1
    %p94 = por %p92, %p93
    %p96 = scmp.ne.s32.totalorder %s81, %s95
    %p97 = scmp.eq.s32.totalorder %s15, 0
    %p98 = por %p96, %p97
    %s99 = ssub.s32 %s16, %s28
    %s100 = ssub.s32 %s17, %s24
    %s101 = sor.u32 %s99, %s100
    %p102 = scmp.eq.s32.totalorder %s101, 0
    %s104 = sadd.s32 %s103, 1
    %s105 = scalar_select %p102, %s103, %s104
    %p108 = pneg %p102
    %p109 = scmp.eq.s32.totalorder %s9, 1
    %p110 = por %p108, %p109
    %p111 = scmp.ne.s32.totalorder %s103, %s106
    %p112 = scmp.eq.s32.totalorder %s9, 0
    %p113 = por %p111, %p112
    %p114 = scmp.ne.s32.totalorder %s103, %s106
    %p115 = scmp.eq.s32.totalorder %s14, 1
    %p116 = por %p114, %p115
    %p117 = scmp.ne.s32.totalorder %s106, %s107
    %p118 = scmp.eq.s32.totalorder %s14, 0
    %p119 = por %p117, %p118
    %p120 = scmp.ne.s32.totalorder %s106, %s107
    %p121 = scmp.eq.s32.totalorder %s15, 1
    %p122 = por %p120, %p121
    %p124 = scmp.ne.s32.totalorder %s107, %s123
    %p125 = scmp.eq.s32.totalorder %s15, 0
    %p126 = por %p124, %p125
    %p127 = scmp.le.s32.totalorder 1, %s9
    %p128 = scmp.lt.s32.totalorder %s9, 3
    %p129 = pnand %p127, %p128
    %p130 = pneg %p129
    // Predicated region
    $region9: #{downsampling_conv_block.1} parent=5 // pred_check
      _
    $region10: #{downsampling_conv_block.1} parent=5 // pred_check_branch
      %132 = sbr.rel (%p129) target = $region12
    $region11: #{downsampling_conv_block.1} parent=5 // pred_region
      %s133 = ssub.s32 %s9, 1
      // Predicated region
      $region13: #{downsampling_conv_block.1} parent=11 // pred_check
        %p134 = pneg %p70
      $region14: #{downsampling_conv_block.1} parent=11 // pred_check_branch
        %136 = sbr.rel (%p134) target = $region16
      $region15: #{downsampling_conv_block.1} parent=11 // pred_region
        _
      $region16: #{downsampling_conv_block.1} parent=11 // pred_fallthru
        _
      // Predicated region
      $region17: #{downsampling_conv_block.1} parent=11 // pred_check
        %p137 = pneg %p91
      $region18: #{downsampling_conv_block.1} parent=11 // pred_check_branch
        %139 = sbr.rel (%p137) target = $region20
      $region19: #{downsampling_conv_block.1} parent=11 // pred_region
        _
      $region20: #{downsampling_conv_block.1} parent=11 // pred_fallthru
        _
    $region12: #{downsampling_conv_block.1} parent=5 // pred_fallthru
      _
    %p140 = scmp.lt.s32.totalorder %s9, 2
    // Predicated region
    $region21: #{downsampling_conv_block.1} parent=5 // pred_check
      %p141 = pneg %p140
    $region22: #{downsampling_conv_block.1} parent=5 // pred_check_branch
      %143 = sbr.rel (%p141) target = $region24
    $region23: #{downsampling_conv_block.1} parent=5 // pred_region
      // Predicated region
      $region25: #{downsampling_conv_block.1} parent=23 // pred_check
        %p144 = pneg %p43
      $region26: #{downsampling_conv_block.1} parent=23 // pred_check_branch
        %146 = sbr.rel (%p144) target = $region28
      $region27: #{downsampling_conv_block.1} parent=23 // pred_region
        %p147 = scmp.lt.s32.totalorder %s16, 1
        %s148 = scalar_select %p147, %s16, 1
        %p149 = scmp.lt.s32.totalorder %s17, 0
        %s150 = scalar_select %p149, %s17, 0
        %s151 = smul.addr %s148, 4
        %s152 = sadd.s32 %s150, %s151
        %s153 = smul.addr %s152, 8
        %s154 = scalar_lea.vmem %s0, %s153
      $region28: #{downsampling_conv_block.1} parent=23 // pred_fallthru
        _
    $region24: #{downsampling_conv_block.1} parent=5 // pred_fallthru
      _
    %p155 = scmp.le.s32.totalorder 1, %s9
    %p156 = scmp.lt.s32.totalorder %s9, 3
    %p157 = pnand %p155, %p156
    %p158 = pneg %p157
    // Predicated region
    $region29: #{downsampling_conv_block.1} parent=5 // pred_check
      _
    $region30: #{downsampling_conv_block.1} parent=5 // pred_check_branch
      %160 = sbr.rel (%p157) target = $region32
    $region31: #{downsampling_conv_block.1} parent=5 // pred_region
      %s161 = ssub.s32 %s9, 1
      %p162 = scmp.lt.s32.totalorder %s18, 1
      %s163 = scalar_select %p162, %s18, 1
      %p164 = scmp.lt.s32.totalorder %s19, 0
      %s165 = scalar_select %p164, %s19, 0
      %s166 = smul.addr %s163, 4
      %s167 = sadd.s32 %s165, %s166
      %s168 = smul.addr %s167, 8
      %s169 = scalar_lea.vmem %s0, %s168
      %p170 = pneg %p49
      %p171 = pneg %p46
      %p172 = pneg %p70
      %p173 = pneg %p67
      %p174 = pneg %p91
      %p175 = pneg %p88
      %p176 = pneg %p119
      %p177 = pneg %p116
      %p178 = scmp.lt.s32.totalorder %s18, 1
      %s179 = scalar_select %p178, %s18, 1
      %p180 = scmp.lt.s32.totalorder %s19, 0
      %s181 = scalar_select %p180, %s19, 0
      %s182 = sadd.s32 %s181, %s179
      %s183 = smul.addr %s182, 8
      %s184 = scalar_lea.vmem %s3, %s183
      %p185 = scmp.lt.s32.totalorder %s18, 1
      %s186 = scalar_select %p185, %s18, 1
      %p187 = scmp.lt.s32.totalorder %s19, 0
      %s188 = scalar_select %p187, %s19, 0
      %s189 = smul.addr %s186, 4
      %s190 = sadd.s32 %s188, %s189
      %s191 = smul.addr %s190, 8
      %s192 = scalar_lea.vmem %s0, %s191
      %p193 = scmp.lt.s32.totalorder %s18, 1
      %s194 = scalar_select %p193, %s18, 1
      %p195 = scmp.lt.s32.totalorder %s19, 0
      %s196 = scalar_select %p195, %s19, 0
      %s197 = sadd.s32 %s196, %s194
      %s198 = smul.addr %s197, 8
      %s199 = scalar_lea.vmem %s3, %s198
      %v200 = vld [vmem:[%s1] sm:$0xff]
      %v201 = vld [vmem:[%s192] sm:$0xff]
      %v202 = vld [vmem:[%s192 + $0x8] sm:$0xff]
      %v203 = vld [vmem:[%s192 + $0x10] sm:$0xff]
      %v204 = vld [vmem:[%s192 + $0x18] sm:$0xff]
      %v205 = vld [vmem:[%s2] sm:$0xff]
      %207 = vset.pattern.permute.xlu0 0
      %208 = vperm.xlu0 %207, %v205
      %v209 = vpop.permute.xlu0 %208
      %vm211 = vcmask 261120
      %v213 = vsel %vm211, %v200, 0
      %215 = vmatprep.subr.mxu0 0.0
      %216 = vmatpush1.msra.mxu0 0.0
      %217 = vmatprep.subr.mxu0 0.0
      %218 = vmatpush1.msra.mxu0 0.0
      %219 = vmatprep.subr.mxu0 0.0
      %220 = vmatpush1.msra.mxu0 0.0
      %221 = vmatprep.subr.mxu0 0.0
      %222 = vmatpush1.msra.mxu0 0.0
      %223 = vmatprep.subr.mxu0 0.0
      %224 = vmatpush1.msra.mxu0 0.0
      %225 = vmatprep.subr.mxu0 0.0
      %226 = vmatpush1.msra.mxu0 0.0
      %227 = vmatprep.subr.mxu0 0.0
      %228 = vmatpush1.msra.mxu0 0.0
      %229 = vmatprep.subr.mxu0 0.0
      %230 = vmatpush1.msra.mxu0 0.0
      %231 = vmatprep.subr.mxu0 0.0
      %232 = vmatpush1.msra.mxu0 0.0
      %233 = vmatprep.subr.mxu0 0.0
      %234 = vmatpush1.msra.mxu0 0.0
      %235 = vmatprep.subr.mxu0 0.0
      %236 = vmatpush1.msra.mxu0 0.0
      %237 = vmatprep.subr.mxu0 0.0
      %238 = vmatpush1.msra.mxu0 0.0
      %239 = vmatprep.subr.mxu0 0.0
      %240 = vmatpush1.msra.mxu0 %v204
      %241 = vmatprep.subr.mxu0 0.0
      %242 = vmatpush1.msra.mxu0 %v203
      %243 = vmatprep.subr.mxu0 0.0
      %244 = vmatpush1.msra.mxu0 %v202
      %245 = vmatprep.subr.mxu0 0.0
      %246 = vmatpush1.msra.mxu0 %v201
      %247 = vmatprep.subr.mxu0 0.0
      %248 = vmatpush2.msra.mxu0 0.0
      %249 = vmatprep.subr.mxu0 0.0
      %250 = vmatpush2.msra.mxu0 0.0
      %251 = vmatprep.subr.mxu0 0.0
      %252 = vmatpush2.msra.mxu0 0.0
      %253 = vmatprep.subr.mxu0 0.0
      %254 = vmatpush2.msra.mxu0 0.0
      %255 = vmatprep.subr.mxu0 0.0
      %256 = vmatpush2.msra.mxu0 0.0
      %257 = vmatprep.subr.mxu0 0.0
      %258 = vmatpush2.msra.mxu0 0.0
      %259 = vmatprep.subr.mxu0 0.0
      %260 = vmatpush2.msra.mxu0 0.0
      %261 = vmatprep.subr.mxu0 0.0
      %262 = vmatpush2.msra.mxu0 0.0
      %263 = vmatprep.subr.mxu0 0.0
      %264 = vmatpush2.msra.mxu0 0.0
      %265 = vmatprep.subr.mxu0 0.0
      %266 = vmatpush2.msra.mxu0 0.0
      %267 = vmatprep.subr.mxu0 0.0
      %268 = vmatpush2.msra.mxu0 0.0
      %269 = vmatprep.subr.mxu0 0.0
      %270 = vmatpush2.msra.mxu0 0.0
      %271 = vmatprep.subr.mxu0 0.0
      %272 = vmatpush2.msra.mxu0 0.0
      %273 = vmatprep.subr.mxu0 0.0
      %274 = vmatpush2.msra.mxu0 0.0
      %275 = vmatprep.subr.mxu0 0.0
      %276 = vmatpush2.msra.mxu0 0.0
      %277 = vmatprep.subr.mxu0 0.0
      %278 = vmatpush2.msra.mxu0 0.0
      %279 = vmatprep.mubr.f32.mxu0 0.0
      %280 = vmatmul.mubr.f32.gmra.mxu0 %v213
      %v281 = vpop.f32.mrf.mxu0
      %v282 = vadd.f32 %v209, %v281
      %v283 = vpop.f32.mrf.mxu0
      %284 = vdwg.mxu0
      %vm285 = vcmp.ge.f32.partialorder %v282, 0.0
      %v286 = vmul.f32 %v282, 0.01
      %v287 = vsel %vm285, %v282, %v286
      %vm288 = vcmask 523264
      %289 = vst.msk [vmem:[%s199] sm:$0xff] %vm288, %v287
      %p290 = scmp.lt.s32.totalorder %s18, 1
      %s291 = scalar_select %p290, %s18, 1
      %p292 = scmp.lt.s32.totalorder %s19, 0
      %s293 = scalar_select %p292, %s19, 0
      %s294 = sadd.s32 %s293, %s291
      %s295 = smul.addr %s294, 8
      %s296 = scalar_lea.vmem %s3, %s295
      // Predicated region
      $region33: #{downsampling_conv_block.1} parent=31 // pred_check
        %p297 = pneg %p116
      $region34: #{downsampling_conv_block.1} parent=31 // pred_check_branch
        %299 = sbr.rel (%p297) target = $region36
      $region35: #{downsampling_conv_block.1} parent=31 // pred_region
        _
      $region36: #{downsampling_conv_block.1} parent=31 // pred_fallthru
        _
    $region32: #{downsampling_conv_block.1} parent=5 // pred_fallthru
      _
    %p300 = scmp.le.s32.totalorder 2, %s9
    // Predicated region
    $region37: #{downsampling_conv_block.1} parent=5 // pred_check
      %p301 = pneg %p300
    $region38: #{downsampling_conv_block.1} parent=5 // pred_check_branch
      %303 = sbr.rel (%p301) target = $region40
    $region39: #{downsampling_conv_block.1} parent=5 // pred_region
      %s304 = ssub.s32 %s9, 2
      // Predicated region
      $region41: #{downsampling_conv_block.1} parent=39 // pred_check
        %p305 = pneg %p122
      $region42: #{downsampling_conv_block.1} parent=39 // pred_check_branch
        %307 = sbr.rel (%p305) target = $region44
      $region43: #{downsampling_conv_block.1} parent=39 // pred_region
        %p308 = scmp.lt.s32.totalorder %s20, 1
        %s309 = scalar_select %p308, %s20, 1
        %p310 = scmp.lt.s32.totalorder %s21, 0
        %s311 = scalar_select %p310, %s21, 0
        %s312 = sadd.s32 %s311, %s309
        %s313 = smul.addr %s312, 8
        %s314 = scalar_lea.vmem %s3, %s313
      $region44: #{downsampling_conv_block.1} parent=39 // pred_fallthru
        _
    $region40: #{downsampling_conv_block.1} parent=5 // pred_fallthru
      _
  $region6: #{downsampling_conv_block.1} parent=0 // loop_footer
    %s13 = sadd.s32 1, %s9
  $region7: #{downsampling_conv_block.1} parent=0 // loop_footer_branch
    %8 = sbr.rel target = $region3
  $region8: #{downsampling_conv_block.1} parent=0 // loop_exit
    _

</llo_original>
